<compile_context>
chip_gen: v7x
topology: tpu7x:2x2x1
jax: 0.10.0
libtpu: 0.0.40
codegen_flags: <defaults>
</compile_context>

<pallas_src>
from functools import partial

import jax
import jax.numpy as jnp
from jax.experimental import pallas as pl
from jax.experimental.pallas import tpu as pltpu

_BF16 = jnp.bfloat16
_F32 = jnp.float32


def _roll_lanes(t, shift):
    """Roll along the last (lane) axis; jnp.roll semantics."""
    h = t.shape[-1]
    if h % 128 == 0:
        return pltpu.roll(t, shift % h, axis=t.ndim - 1)     # XLU rotate
    return jnp.roll(t, shift, axis=-1)                        # slice + concat


def _apply_rope(t, cos_ref, sin_a_ref, sin_b_ref):
    """Interleaved RoPE on an (S, H) f32 slab using pre-masked bf16 tables.

    rot[2i] = -t[2i+1], rot[2i+1] = t[2i], realised as
        t*cos + roll(t,-1)*sin_a + roll(t,+1)*sin_b.
    The cross-head wrap-around of the rolls is harmless because sin_a is
    zeroed on odd lanes and sin_b on even lanes (head_dim is even), so any
    leaked lane always multiplies 0.  Arithmetic stays f32 (v5e has no bf16
    VPU/EUP); the tables ship in bf16 only to halve their HBM/VMEM footprint.
    """
    cos = cos_ref[...].astype(_F32)
    sin_a = sin_a_ref[...].astype(_F32)
    sin_b = sin_b_ref[...].astype(_F32)
    return t * cos + _roll_lanes(t, -1) * sin_a + _roll_lanes(t, 1) * sin_b


def _kv_prep_kernel(y_ref, wk_ref, wv_ref, ck_ref, sak_ref, sbk_ref,
                    k_ref, v_ref, *, n_head, head_dim):
    """One-shot (per batch element) K/V projection + K-side RoPE, head-major out."""
    y = y_ref[0]                                                   # (Skv, H) bf16
    k = jnp.dot(y, wk_ref[...], preferred_element_type=_F32)      # (Skv, H) f32
    v = jnp.dot(y, wv_ref[...], preferred_element_type=_F32)      # (Skv, H) f32
    k = _apply_rope(k, ck_ref, sak_ref, sbk_ref)
    kb = k.astype(_BF16)
    vb = v.astype(_BF16)
    hd = head_dim
    for h in range(n_head):                                        # static unroll
        sl = slice(h * hd, (h + 1) * hd)
        k_ref[0, h] = kb[:, sl]
        v_ref[0, h] = vb[:, sl]


def _attn_kernel(x_ref, wq_ref, wo_ref, cq_ref, saq_ref, sbq_ref,
                 k_ref, v_ref, o_ref, ctx_ref, *, n_head, head_dim):
    x = x_ref[0]                                                   # (tq, H) bf16
    q = jnp.dot(x, wq_ref[...], preferred_element_type=_F32)      # (tq, H) f32
    q = _apply_rope(q, cq_ref, saq_ref, sbq_ref)
    qb = q.astype(_BF16)

    hd = head_dim
    # Static Python head loop: all lane slices of qb / ctx_ref have static
    # offsets; K/V head selection is a free leading-dim index.
    for h in range(n_head):
        sl = slice(h * hd, (h + 1) * hd)
        kh = k_ref[0, h]                                           # (Skv, hd) bf16
        vh = v_ref[0, h]                                           # (Skv, hd) bf16
        # Scores: the reference module applies NO 1/sqrt(head_dim) scaling.
        s = jax.lax.dot_general(qb[:, sl], kh, (((1,), (1,)), ((), ())),
                                preferred_element_type=_F32)       # (tq, Skv)
        m = jnp.max(s, axis=-1, keepdims=True)
        e = jnp.exp(s - m)                                         # f32 softmax math
        l = jnp.sum(e, axis=-1, keepdims=True)
        # Deferred normalisation: unnormalised e @ v, then one (tq,1) rcp*mul.
        head = jnp.dot(e.astype(_BF16), vh, preferred_element_type=_F32)
        head = head * pl.reciprocal(l, approx=True)
        ctx_ref[:, sl] = head.astype(_BF16)

    # Single full-width (K = H) output projection at full MXU utilisation.
    o = jnp.dot(ctx_ref[...], wo_ref[...], preferred_element_type=_F32)
    o_ref[0] = o.astype(o_ref.dtype)


def _rope_tables(seq_len, head_dim, n_head, dtype=_BF16):
    """cos / masked-sin tables tiled to (seq, hidden), matching the module."""
    pos = jnp.arange(seq_len, dtype=_F32)[:, None]
    ids = jnp.arange(head_dim // 2, dtype=_F32)
    theta = 10000.0 ** (2.0 * ids / head_dim)
    ang = pos / theta                                              # (S, hd/2)
    sin = jnp.repeat(jnp.sin(ang), 2, axis=-1)                     # [s0,s0,s1,s1,..]
    cos = jnp.repeat(jnp.cos(ang), 2, axis=-1)                     # [c0,c0,c1,c1,..]
    sin = jnp.tile(sin, (1, n_head))                               # (S, H)
    cos = jnp.tile(cos, (1, n_head))                               # (S, H)
    even = (jnp.arange(head_dim * n_head) % 2) == 0
    sin_a = jnp.where(even, -sin, 0.0)    # multiplies roll(t,-1) == t[j+1]
    sin_b = jnp.where(even, 0.0, sin)     # multiplies roll(t,+1) == t[j-1]
    return cos.astype(dtype), sin_a.astype(dtype), sin_b.astype(dtype)


def _vmem_budget_bytes():
    """Generation-aware VMEM budget (v7x: 64 MiB physical, v5e/v6e: 128 MiB)."""
    cap = 64 * 1024 * 1024                      # safe default works on all gens
    try:
        cap = getattr(pltpu.get_tpu_info(), "vmem_capacity_bytes", cap)
    except Exception:
        pass
    return min(int(cap * 3 // 4), 100 * 1024 * 1024)


def _pick_tq(Skv, H, n_head, head_dim, out_bytes, budget):
    """Largest query-tile size whose per-step resident set fits the budget."""
    lane_hd = max(head_dim, 128)                # lane padding of head-major K/V
    kv = 2 * 2 * n_head * Skv * lane_hd * 2     # K + V, double-buffered bf16
    wts = 2 * 2 * H * H * 2                     # wq + wo, double-buffered bf16

    def est(tq):
        x_t = 2 * tq * H * 2                    # x tile
        tabs = 2 * 3 * tq * H * 2               # q RoPE tables (bf16)
        o_t = 2 * tq * H * out_bytes            # output tile
        ctx = tq * H * 2                        # context scratch
        live = 4 * tq * H * 4 + 2 * tq * Skv * 4  # f32 intermediates headroom
        return kv + wts + x_t + tabs + o_t + ctx + live

    for cand in (1024, 512, 256, 128):
        if est(cand) <= budget:
            return cand
    return 128


def rotary_cross_attention(x, y, wq, wkv, wo, n_head, out_dtype=None):
    B, Sq, H = x.shape
    Skv = y.shape[1]
    hd = H // n_head
    assert H % n_head == 0 and hd % 2 == 0
    out_dtype = x.dtype if out_dtype is None else out_dtype
    out_bytes = jnp.dtype(out_dtype).itemsize

    # Split the interleaved per-head [k_h | v_h] kv projection into contiguous
    # K and V weight slabs once, outside the kernels.
    wkv_r = wkv.reshape(H, n_head, 2, hd)
    wk = wkv_r[:, :, 0, :].reshape(H, H)
    wv = wkv_r[:, :, 1, :].reshape(H, H)

    x16, y16 = x.astype(_BF16), y.astype(_BF16)
    wq16, wk16, wv16, wo16 = (w.astype(_BF16) for w in (wq, wk, wv, wo))

    budget = _vmem_budget_bytes()

    # ---- one-shot K/V projection + K RoPE, hoisted out of the query grid ----
    cos_k, sin_a_k, sin_b_k = _rope_tables(Skv, hd, n_head)
    k_heads, v_heads = pl.pallas_call(
        partial(_kv_prep_kernel, n_head=n_head, head_dim=hd),
        out_shape=(jax.ShapeDtypeStruct((B, n_head, Skv, hd), _BF16),
                   jax.ShapeDtypeStruct((B, n_head, Skv, hd), _BF16)),
        grid=(B,),
        in_specs=[
            pl.BlockSpec((1, Skv, H), lambda b: (b, 0, 0)),   # y
            pl.BlockSpec((H, H), lambda b: (0, 0)),           # wk
            pl.BlockSpec((H, H), lambda b: (0, 0)),           # wv
            pl.BlockSpec((Skv, H), lambda b: (0, 0)),          # cos_k
            pl.BlockSpec((Skv, H), lambda b: (0, 0)),          # sin_a_k
            pl.BlockSpec((Skv, H), lambda b: (0, 0)),          # sin_b_k
        ],
        out_specs=(pl.BlockSpec((1, n_head, Skv, hd), lambda b: (b, 0, 0, 0)),
                   pl.BlockSpec((1, n_head, Skv, hd), lambda b: (b, 0, 0, 0))),
        compiler_params=pltpu.CompilerParams(
            dimension_semantics=("parallel",),
            vmem_limit_bytes=budget),
    )(y16, wk16, wv16, cos_k, sin_a_k, sin_b_k)

    # ---- query tiling: generation-aware budget, padded (never unbounded) ----
    tq_max = _pick_tq(Skv, H, n_head, hd, out_bytes, budget)
    if Sq <= tq_max:
        tq, Sq_pad = Sq, Sq
    else:
        tq = tq_max
        Sq_pad = ((Sq + tq - 1) // tq) * tq
        if Sq_pad != Sq:
            x16 = jnp.pad(x16, ((0, 0), (0, Sq_pad - Sq), (0, 0)))
    n_qt = Sq_pad // tq

    cos_q, sin_a_q, sin_b_q = _rope_tables(Sq_pad, hd, n_head)

    def const(shape):
        zeros = (0,) * len(shape)
        return pl.BlockSpec(shape, lambda b, t: zeros)

    q_row = lambda shape: pl.BlockSpec(shape, lambda b, t: (t, 0))

    out = pl.pallas_call(
        partial(_attn_kernel, n_head=n_head, head_dim=hd),
        out_shape=jax.ShapeDtypeStruct((B, Sq_pad, H), out_dtype),
        grid=(B, n_qt),
        in_specs=[
            pl.BlockSpec((1, tq, H), lambda b, t: (b, t, 0)),     # x
            const((H, H)),            # wq
            const((H, H)),            # wo
            q_row((tq, H)),           # cos_q   (bf16)
            q_row((tq, H)),           # sin_a_q (bf16)
            q_row((tq, H)),           # sin_b_q (bf16)
            pl.BlockSpec((1, n_head, Skv, hd), lambda b, t: (b, 0, 0, 0)),  # K
            pl.BlockSpec((1, n_head, Skv, hd), lambda b, t: (b, 0, 0, 0)),  # V
        ],
        out_specs=pl.BlockSpec((1, tq, H), lambda b, t: (b, t, 0)),
        scratch_shapes=[pltpu.VMEM((tq, H), _BF16)],               # context scratch
        compiler_params=pltpu.CompilerParams(
            dimension_semantics=("parallel", "parallel"),
            vmem_limit_bytes=budget),
    )(x16, wq16, wo16, cos_q, sin_a_q, sin_b_q, k_heads, v_heads)

    return out[:, :Sq, :] if Sq_pad != Sq else out


def reference(x, y, wq, wkv, wo, n_head,
              matmul_dtype=jnp.float32, table_dtype=jnp.float32):
    """Pure-JAX port of the PyTorch forward (inference path).

    `matmul_dtype` / `table_dtype` mirror the kernel's precision policy (bf16
    matmul operands with f32 accumulation, bf16 RoPE tables) so the comparison
    isolates structural correctness.
    """
    B, Sq, H = x.shape
    Skv = y.shape[1]
    hd = H // n_head
    md = matmul_dtype

    def mm(a, b):
        return jnp.dot(a.astype(md), b.astype(md), preferred_element_type=jnp.float32)

    q = mm(x, wq).reshape(B, Sq, n_head, hd).transpose(0, 2, 1, 3)
    kv = mm(y, wkv).reshape(B, Skv, n_head, 2 * hd).transpose(0, 2, 1, 3)
    k, v = kv[..., :hd], kv[..., hd:]

    def sincos(seq_len):
        pos = jnp.arange(seq_len, dtype=jnp.float32)[:, None]
        ids = jnp.arange(hd // 2, dtype=jnp.float32)
        theta = 10000.0 ** (2.0 * ids / hd)
        ang = pos / theta
        sin = jnp.repeat(jnp.sin(ang), 2, -1).astype(table_dtype).astype(jnp.float32)
        cos = jnp.repeat(jnp.cos(ang), 2, -1).astype(table_dtype).astype(jnp.float32)
        return sin, cos

    def rope(t):
        sin, cos = sincos(t.shape[2])
        t_rot = jnp.stack([-t[..., 1::2], t[..., 0::2]], axis=-1).reshape(t.shape)
        return t * cos + t_rot * sin

    q, k = rope(q), rope(k)
    s = jnp.einsum('bhqd,bhkd->bhqk', q.astype(md), k.astype(md),
                   preferred_element_type=jnp.float32)      # no scale (matches module)
    p = jax.nn.softmax(s, axis=-1)
    o = jnp.einsum('bhqk,bhkd->bhqd', p.astype(md), v.astype(md),
                   preferred_element_type=jnp.float32)
    o = o.transpose(0, 2, 1, 3).reshape(B, Sq, H)
    return mm(o, wo)


if __name__ == "__main__":
    B, Sq, Skv, H, n_head = 2, 16, 8, 32, 4
    key = jax.random.PRNGKey(0)
    k1, k2, k3, k4, k5 = jax.random.split(key, 5)

    x = jax.random.normal(k1, (B, Sq, H), jnp.float32)
    y = jax.random.normal(k2, (B, Skv, H), jnp.float32)
    # Deterministic synthetic weights, stored as [in, out].
    wq = jax.random.normal(k3, (H, H), jnp.float32) * (H ** -0.5)
    wkv = jax.random.normal(k4, (H, 2 * H), jnp.float32) * (H ** -0.5)
    wo = jax.random.normal(k5, (H, H), jnp.float32) * (H ** -0.5)

    out = jax.block_until_ready(rotary_cross_attention(x, y, wq, wkv, wo, n_head))
    assert out.shape == (B, Sq, H)
    assert out.dtype == x.dtype     # output is emitted in the caller's dtype

    # The kernel uses bf16 MXU operands (f32 accumulation), bf16 RoPE tables
    # and an approximate reciprocal for the softmax normaliser, so compare
    # against a reference that mirrors the bf16 precision policy with a
    # correspondingly relaxed tolerance.
    ref = reference(x, y, wq, wkv, wo, n_head,
                    matmul_dtype=jnp.bfloat16, table_dtype=jnp.bfloat16)
    err = float(jnp.max(jnp.abs(out - ref)))
    assert jnp.allclose(out, ref, atol=3e-2, rtol=3e-2), f"max abs err {err}"

    print("KERNEL_OK")
</pallas_src>

<mosaic_0001>
module attributes {stable_mosaic.version = 11 : i64} {
  func.func @_kv_prep_kernel(%arg0: i32, %arg1: memref<1x8x32xbf16, #tpu.memory_space<vmem>>, %arg2: memref<32x32xbf16, #tpu.memory_space<vmem>>, %arg3: memref<32x32xbf16, #tpu.memory_space<vmem>>, %arg4: memref<8x32xbf16, #tpu.memory_space<vmem>>, %arg5: memref<8x32xbf16, #tpu.memory_space<vmem>>, %arg6: memref<8x32xbf16, #tpu.memory_space<vmem>>, %arg7: memref<1x4x8x8xbf16, #tpu.memory_space<vmem>>, %arg8: memref<1x4x8x8xbf16, #tpu.memory_space<vmem>>) attributes {dimension_semantics = [#tpu.dimension_semantics<parallel>], iteration_bounds = array<i64: 2>, scalar_prefetch = 0 : i64, scratch_operands = 0 : i64, tpu.core_type = #tpu.core_type<tc>, window_params = [{transform_indices = @transform_0, window_bounds = array<i64: 1, 8, 32>}, {pipeline_mode = #tpu.pipeline_mode<synchronous>, transform_indices = @transform_1, window_bounds = array<i64: 32, 32>}, {pipeline_mode = #tpu.pipeline_mode<synchronous>, transform_indices = @transform_2, window_bounds = array<i64: 32, 32>}, {pipeline_mode = #tpu.pipeline_mode<synchronous>, transform_indices = @transform_3, window_bounds = array<i64: 8, 32>}, {pipeline_mode = #tpu.pipeline_mode<synchronous>, transform_indices = @transform_4, window_bounds = array<i64: 8, 32>}, {pipeline_mode = #tpu.pipeline_mode<synchronous>, transform_indices = @transform_5, window_bounds = array<i64: 8, 32>}, {transform_indices = @transform_6, window_bounds = array<i64: 1, 4, 8, 8>}, {transform_indices = @transform_7, window_bounds = array<i64: 1, 4, 8, 8>}]} {
    %c0 = arith.constant 0 : index
    %c0_0 = arith.constant 0 : index
    %c0_1 = arith.constant 0 : index
    %0 = vector.load %arg1[%c0, %c0_0, %c0_1] : memref<1x8x32xbf16, #tpu.memory_space<vmem>>, vector<1x8x32xbf16>
    %1 = vector.shape_cast %0 : vector<1x8x32xbf16> to vector<8x32xbf16>
    %c0_2 = arith.constant 0 : index
    %c0_3 = arith.constant 0 : index
    %2 = vector.load %arg2[%c0_2, %c0_3] : memref<32x32xbf16, #tpu.memory_space<vmem>>, vector<32x32xbf16>
    %cst = arith.constant dense<0.000000e+00> : vector<8x32xf32>
    %3 = tpu.matmul %1, %2, %cst {dimension_numbers = #tpu.dot_dimension_numbers<[1], [0], [0], [1], [0, 0, 1, 1], [], []>} : vector<8x32xbf16>, vector<32x32xbf16>, vector<8x32xf32> -> vector<8x32xf32>
    %c0_4 = arith.constant 0 : index
    %c0_5 = arith.constant 0 : index
    %4 = vector.load %arg3[%c0_4, %c0_5] : memref<32x32xbf16, #tpu.memory_space<vmem>>, vector<32x32xbf16>
    %cst_6 = arith.constant dense<0.000000e+00> : vector<8x32xf32>
    %5 = tpu.matmul %1, %4, %cst_6 {dimension_numbers = #tpu.dot_dimension_numbers<[1], [0], [0], [1], [0, 0, 1, 1], [], []>} : vector<8x32xbf16>, vector<32x32xbf16>, vector<8x32xf32> -> vector<8x32xf32>
    %c0_7 = arith.constant 0 : index
    %c0_8 = arith.constant 0 : index
    %6 = vector.load %arg4[%c0_7, %c0_8] : memref<8x32xbf16, #tpu.memory_space<vmem>>, vector<8x32xbf16>
    %7 = arith.extf %6 : vector<8x32xbf16> to vector<8x32xf32>
    %c0_9 = arith.constant 0 : index
    %c0_10 = arith.constant 0 : index
    %8 = vector.load %arg5[%c0_9, %c0_10] : memref<8x32xbf16, #tpu.memory_space<vmem>>, vector<8x32xbf16>
    %9 = arith.extf %8 : vector<8x32xbf16> to vector<8x32xf32>
    %c0_11 = arith.constant 0 : index
    %c0_12 = arith.constant 0 : index
    %10 = vector.load %arg6[%c0_11, %c0_12] : memref<8x32xbf16, #tpu.memory_space<vmem>>, vector<8x32xbf16>
    %11 = arith.extf %10 : vector<8x32xbf16> to vector<8x32xf32>
    %12 = arith.mulf %3, %7 : vector<8x32xf32>
    %13 = vector.extract_strided_slice %3 {offsets = [0, 1], sizes = [8, 31], strides = [1, 1]} : vector<8x32xf32> to vector<8x31xf32>
    %14 = vector.extract_strided_slice %3 {offsets = [0, 0], sizes = [8, 1], strides = [1, 1]} : vector<8x32xf32> to vector<8x1xf32>
    %15 = tpu.concatenate %13, %14 in 1 : vector<8x31xf32>, vector<8x1xf32> -> vector<8x32xf32>
    %16 = arith.mulf %15, %9 : vector<8x32xf32>
    %17 = arith.addf %12, %16 : vector<8x32xf32>
    %18 = vector.extract_strided_slice %3 {offsets = [0, 31], sizes = [8, 1], strides = [1, 1]} : vector<8x32xf32> to vector<8x1xf32>
    %19 = vector.extract_strided_slice %3 {offsets = [0, 0], sizes = [8, 31], strides = [1, 1]} : vector<8x32xf32> to vector<8x31xf32>
    %20 = tpu.concatenate %18, %19 in 1 : vector<8x1xf32>, vector<8x31xf32> -> vector<8x32xf32>
    %21 = arith.mulf %20, %11 : vector<8x32xf32>
    %22 = arith.addf %17, %21 : vector<8x32xf32>
    %23 = arith.truncf %22 : vector<8x32xf32> to vector<8x32xbf16>
    %24 = arith.truncf %5 : vector<8x32xf32> to vector<8x32xbf16>
    %25 = vector.extract_strided_slice %23 {offsets = [0, 0], sizes = [8, 8], strides = [1, 1]} : vector<8x32xbf16> to vector<8x8xbf16>
    %c0_13 = arith.constant 0 : index
    %c0_14 = arith.constant 0 : index
    %c0_15 = arith.constant 0 : index
    %c0_16 = arith.constant 0 : index
    %26 = vector.load %arg7[%c0_13, %c0_14, %c0_15, %c0_16] : memref<1x4x8x8xbf16, #tpu.memory_space<vmem>>, vector<1x1x8x8xbf16>
    %27 = vector.shape_cast %26 : vector<1x1x8x8xbf16> to vector<8x8xbf16>
    %28 = vector.shape_cast %25 : vector<8x8xbf16> to vector<1x1x8x8xbf16>
    tpu.vector_store %arg7[%c0_13, %c0_14, %c0_15, %c0_16], %28 {strides = array<i32>} : memref<1x4x8x8xbf16, #tpu.memory_space<vmem>>, vector<1x1x8x8xbf16>,
    %29 = vector.extract_strided_slice %24 {offsets = [0, 0], sizes = [8, 8], strides = [1, 1]} : vector<8x32xbf16> to vector<8x8xbf16>
    %c0_17 = arith.constant 0 : index
    %c0_18 = arith.constant 0 : index
    %c0_19 = arith.constant 0 : index
    %c0_20 = arith.constant 0 : index
    %30 = vector.load %arg8[%c0_17, %c0_18, %c0_19, %c0_20] : memref<1x4x8x8xbf16, #tpu.memory_space<vmem>>, vector<1x1x8x8xbf16>
    %31 = vector.shape_cast %30 : vector<1x1x8x8xbf16> to vector<8x8xbf16>
    %32 = vector.shape_cast %29 : vector<8x8xbf16> to vector<1x1x8x8xbf16>
    tpu.vector_store %arg8[%c0_17, %c0_18, %c0_19, %c0_20], %32 {strides = array<i32>} : memref<1x4x8x8xbf16, #tpu.memory_space<vmem>>, vector<1x1x8x8xbf16>,
    %33 = vector.extract_strided_slice %23 {offsets = [0, 8], sizes = [8, 8], strides = [1, 1]} : vector<8x32xbf16> to vector<8x8xbf16>
    %c0_21 = arith.constant 0 : index
    %c1 = arith.constant 1 : index
    %c0_22 = arith.constant 0 : index
    %c0_23 = arith.constant 0 : index
    %34 = vector.load %arg7[%c0_21, %c1, %c0_22, %c0_23] : memref<1x4x8x8xbf16, #tpu.memory_space<vmem>>, vector<1x1x8x8xbf16>
    %35 = vector.shape_cast %34 : vector<1x1x8x8xbf16> to vector<8x8xbf16>
    %36 = vector.shape_cast %33 : vector<8x8xbf16> to vector<1x1x8x8xbf16>
    tpu.vector_store %arg7[%c0_21, %c1, %c0_22, %c0_23], %36 {strides = array<i32>} : memref<1x4x8x8xbf16, #tpu.memory_space<vmem>>, vector<1x1x8x8xbf16>,
    %37 = vector.extract_strided_slice %24 {offsets = [0, 8], sizes = [8, 8], strides = [1, 1]} : vector<8x32xbf16> to vector<8x8xbf16>
    %c0_24 = arith.constant 0 : index
    %c1_25 = arith.constant 1 : index
    %c0_26 = arith.constant 0 : index
    %c0_27 = arith.constant 0 : index
    %38 = vector.load %arg8[%c0_24, %c1_25, %c0_26, %c0_27] : memref<1x4x8x8xbf16, #tpu.memory_space<vmem>>, vector<1x1x8x8xbf16>
    %39 = vector.shape_cast %38 : vector<1x1x8x8xbf16> to vector<8x8xbf16>
    %40 = vector.shape_cast %37 : vector<8x8xbf16> to vector<1x1x8x8xbf16>
    tpu.vector_store %arg8[%c0_24, %c1_25, %c0_26, %c0_27], %40 {strides = array<i32>} : memref<1x4x8x8xbf16, #tpu.memory_space<vmem>>, vector<1x1x8x8xbf16>,
    %41 = vector.extract_strided_slice %23 {offsets = [0, 16], sizes = [8, 8], strides = [1, 1]} : vector<8x32xbf16> to vector<8x8xbf16>
    %c0_28 = arith.constant 0 : index
    %c2 = arith.constant 2 : index
    %c0_29 = arith.constant 0 : index
    %c0_30 = arith.constant 0 : index
    %42 = vector.load %arg7[%c0_28, %c2, %c0_29, %c0_30] : memref<1x4x8x8xbf16, #tpu.memory_space<vmem>>, vector<1x1x8x8xbf16>
    %43 = vector.shape_cast %42 : vector<1x1x8x8xbf16> to vector<8x8xbf16>
    %44 = vector.shape_cast %41 : vector<8x8xbf16> to vector<1x1x8x8xbf16>
    tpu.vector_store %arg7[%c0_28, %c2, %c0_29, %c0_30], %44 {strides = array<i32>} : memref<1x4x8x8xbf16, #tpu.memory_space<vmem>>, vector<1x1x8x8xbf16>,
    %45 = vector.extract_strided_slice %24 {offsets = [0, 16], sizes = [8, 8], strides = [1, 1]} : vector<8x32xbf16> to vector<8x8xbf16>
    %c0_31 = arith.constant 0 : index
    %c2_32 = arith.constant 2 : index
    %c0_33 = arith.constant 0 : index
    %c0_34 = arith.constant 0 : index
    %46 = vector.load %arg8[%c0_31, %c2_32, %c0_33, %c0_34] : memref<1x4x8x8xbf16, #tpu.memory_space<vmem>>, vector<1x1x8x8xbf16>
    %47 = vector.shape_cast %46 : vector<1x1x8x8xbf16> to vector<8x8xbf16>
    %48 = vector.shape_cast %45 : vector<8x8xbf16> to vector<1x1x8x8xbf16>
    tpu.vector_store %arg8[%c0_31, %c2_32, %c0_33, %c0_34], %48 {strides = array<i32>} : memref<1x4x8x8xbf16, #tpu.memory_space<vmem>>, vector<1x1x8x8xbf16>,
    %49 = vector.extract_strided_slice %23 {offsets = [0, 24], sizes = [8, 8], strides = [1, 1]} : vector<8x32xbf16> to vector<8x8xbf16>
    %c0_35 = arith.constant 0 : index
    %c3 = arith.constant 3 : index
    %c0_36 = arith.constant 0 : index
    %c0_37 = arith.constant 0 : index
    %50 = vector.load %arg7[%c0_35, %c3, %c0_36, %c0_37] : memref<1x4x8x8xbf16, #tpu.memory_space<vmem>>, vector<1x1x8x8xbf16>
    %51 = vector.shape_cast %50 : vector<1x1x8x8xbf16> to vector<8x8xbf16>
    %52 = vector.shape_cast %49 : vector<8x8xbf16> to vector<1x1x8x8xbf16>
    tpu.vector_store %arg7[%c0_35, %c3, %c0_36, %c0_37], %52 {strides = array<i32>} : memref<1x4x8x8xbf16, #tpu.memory_space<vmem>>, vector<1x1x8x8xbf16>,
    %53 = vector.extract_strided_slice %24 {offsets = [0, 24], sizes = [8, 8], strides = [1, 1]} : vector<8x32xbf16> to vector<8x8xbf16>
    %c0_38 = arith.constant 0 : index
    %c3_39 = arith.constant 3 : index
    %c0_40 = arith.constant 0 : index
    %c0_41 = arith.constant 0 : index
    %54 = vector.load %arg8[%c0_38, %c3_39, %c0_40, %c0_41] : memref<1x4x8x8xbf16, #tpu.memory_space<vmem>>, vector<1x1x8x8xbf16>
    %55 = vector.shape_cast %54 : vector<1x1x8x8xbf16> to vector<8x8xbf16>
    %56 = vector.shape_cast %53 : vector<8x8xbf16> to vector<1x1x8x8xbf16>
    tpu.vector_store %arg8[%c0_38, %c3_39, %c0_40, %c0_41], %56 {strides = array<i32>} : memref<1x4x8x8xbf16, #tpu.memory_space<vmem>>, vector<1x1x8x8xbf16>,
    return
  }
  func.func @transform_0(%arg0: i32) -> (i32, i32, i32) {
    %c0_i32 = arith.constant 0 : i32
    %c0_i32_0 = arith.constant 0 : i32
    %c0_i32_1 = arith.constant 0 : i32
    return %arg0, %c0_i32, %c0_i32_0 : i32, i32, i32
  }
  func.func @transform_1(%arg0: i32) -> (i32, i32) {
    %c0_i32 = arith.constant 0 : i32
    %c0_i32_0 = arith.constant 0 : i32
    %c0_i32_1 = arith.constant 0 : i32
    return %c0_i32, %c0_i32_0 : i32, i32
  }
  func.func @transform_2(%arg0: i32) -> (i32, i32) {
    %c0_i32 = arith.constant 0 : i32
    %c0_i32_0 = arith.constant 0 : i32
    %c0_i32_1 = arith.constant 0 : i32
    return %c0_i32, %c0_i32_0 : i32, i32
  }
  func.func @transform_3(%arg0: i32) -> (i32, i32) {
    %c0_i32 = arith.constant 0 : i32
    %c0_i32_0 = arith.constant 0 : i32
    %c0_i32_1 = arith.constant 0 : i32
    return %c0_i32, %c0_i32_0 : i32, i32
  }
  func.func @transform_4(%arg0: i32) -> (i32, i32) {
    %c0_i32 = arith.constant 0 : i32
    %c0_i32_0 = arith.constant 0 : i32
    %c0_i32_1 = arith.constant 0 : i32
    return %c0_i32, %c0_i32_0 : i32, i32
  }
  func.func @transform_5(%arg0: i32) -> (i32, i32) {
    %c0_i32 = arith.constant 0 : i32
    %c0_i32_0 = arith.constant 0 : i32
    %c0_i32_1 = arith.constant 0 : i32
    return %c0_i32, %c0_i32_0 : i32, i32
  }
  func.func @transform_6(%arg0: i32) -> (i32, i32, i32, i32) {
    %c0_i32 = arith.constant 0 : i32
    %c0_i32_0 = arith.constant 0 : i32
    %c0_i32_1 = arith.constant 0 : i32
    %c0_i32_2 = arith.constant 0 : i32
    return %arg0, %c0_i32, %c0_i32_0, %c0_i32_1 : i32, i32, i32, i32
  }
  func.func @transform_7(%arg0: i32) -> (i32, i32, i32, i32) {
    %c0_i32 = arith.constant 0 : i32
    %c0_i32_0 = arith.constant 0 : i32
    %c0_i32_1 = arith.constant 0 : i32
    %c0_i32_2 = arith.constant 0 : i32
    return %arg0, %c0_i32, %c0_i32_0, %c0_i32_1 : i32, i32, i32, i32
  }
}

</mosaic_0001>

<llo_original>
// kernel: tpu_custom_call.1
$region0: #{tpu_custom_call.1}
  #allocation0 [shape = 'u32[]', space=smem, size = 0x4, offset = 0x4, fixed_abs, tag = 'smem constant byte address 0x4 - core index']
  #allocation1 [shape = 'u32[144,128]{1,0:T(1,128)}', space=vmem, size = 0x12000, scoped, tag = 'internal scratch']
  %s0 = inlined_call_operand.hbm [shape: bf16[2,8,32], index: 0, kind: input, shape index: {}]
  %s1 = inlined_call_operand.hbm [shape: bf16[32,32], index: 1, kind: input, shape index: {}]
  %s2 = inlined_call_operand.hbm [shape: bf16[32,32], index: 2, kind: input, shape index: {}]
  %s3 = inlined_call_operand.vmem [shape: bf16[8,32], index: 3, kind: input, shape index: {}]
  %s4 = inlined_call_operand.vmem [shape: bf16[8,32], index: 4, kind: input, shape index: {}]
  %s5 = inlined_call_operand.vmem [shape: bf16[8,32], index: 5, kind: input, shape index: {}]
  %s6 = inlined_call_operand.hbm [shape: bf16[2,4,8,8], index: 6, kind: output, shape index: {0}]
  %s7 = inlined_call_operand.hbm [shape: bf16[2,4,8,8], index: 7, kind: output, shape index: {1}]
  %8 = xla_tuple %s6, %s7
  %s9 = sld [smem:[#allocation0]]
  $region77: #{tpu_custom_call.1} parent=0
    _
  %s11 = ssub.s32 1, %s9
  %s12 = scalar_select 0, %s11, %s9
  $region1: #{tpu_custom_call.1} parent=0
    #allocation2 [shape = 'u8[4096]{0}', space=vmem, size = 0x1000, scoped, tag = 'input window, operand 0']
    #allocation3 [shape = 's32[2]{0}', space=sflag, size = 0x8, scoped, tag = 'scoped memory for tpu_custom_call.1']
    #allocation4 [shape = 's32[2]{0}', space=sflag, size = 0x8, scoped, tag = 'scoped memory for tpu_custom_call.1']
    #allocation5 [shape = 'u8[8192]{0}', space=vmem, size = 0x2000, scoped, tag = 'input window, operand 1, single buffered']
    #allocation6 [shape = 's32[1]{0}', space=sflag, size = 0x4, scoped, tag = 'scoped memory for tpu_custom_call.1']
    #allocation7 [shape = 'u8[8192]{0}', space=vmem, size = 0x2000, scoped, tag = 'input window, operand 2, single buffered']
    #allocation8 [shape = 'u8[16384]{0}', space=vmem, size = 0x4000, scoped, tag = 'output window, operand 0']
    #allocation9 [shape = 'u8[16384]{0}', space=vmem, size = 0x4000, scoped, tag = 'output window, operand 1']
    #allocation10 [shape = 's32[2]{0}', space=sflag, size = 0x8, scoped, tag = 'scoped memory for tpu_custom_call.1']
    %13 = vsyncpa [#allocation3], 0
    %s14 = scalar_lea.sflag [#allocation3], 1
    %15 = vsyncpa %s14, 0
    %16 = vsyncpa [#allocation6], 0
    %17 = vsyncpa [#allocation4], 0
    %s18 = scalar_lea.sflag [#allocation4], 1
    %19 = vsyncpa %s18, 0
    %20 = vsyncpa [#allocation10], 0
    %s21 = scalar_lea.sflag [#allocation10], 1
    %22 = vsyncpa %s21, 0
    loop: start=0, step=1, limit=4
    $region2: #{tpu_custom_call.1} parent=1 // loop_pre_header
      _
    $region3: #{tpu_custom_call.1} parent=1 // loop_header
      %s24 = sphi 0, %s28
      %p25 = scmp.ge.s32.totalorder %s24, 4
      %s34 = sphi 0, %s36
      %s37 = sphi 0, %s34
      %s38 = sphi 0, %s37
      %s54 = sphi 0, %s38
      %s58 = sphi 0, %s58
      %s60 = sphi 0, %s58
      %s61 = sphi 0, %s60
      %s75 = sphi 0, %s61
      %s79 = sphi 0, %s79
      %s81 = sphi 0, %s79
      %s82 = sphi 0, %s81
      %s96 = sphi 0, %s82
      %s100 = sphi 0, %s100
      %s102 = sphi 0, %s100
      %s103 = sphi 0, %s102
      %s117 = sphi 0, %s103
      %s121 = sphi 0, %s121
      %s123 = sphi 0, %s121
      %s124 = sphi 0, %s123
      %s138 = sphi 0, %s124
      %s142 = sphi 0, %s142
      %s144 = sphi 0, %s142
      %s145 = sphi 0, %s144
      %s159 = sphi 0, %s145
      %s165 = sphi 0, %s167
      %s168 = sphi 0, %s165
      %s169 = sphi 0, %s168
      %s185 = sphi 0, %s169
      %s191 = sphi 0, %s193
      %s194 = sphi 0, %s191
      %s195 = sphi 0, %s194
      %s211 = sphi 0, %s195
    $region4: #{tpu_custom_call.1} parent=1 // loop_header_branch
      %27 = sbr.rel (%p25) target = $region8
    $region5: #{tpu_custom_call.1} parent=1 // loop_body
      %s29 = ssub.s32 %s24, 1
      %s30 = ssub.s32 %s24, 2
      %s31 = sadd.s32 %s24, 1
      %s32 = ssub.s32 %s24, %s31
      %p33 = scmp.eq.s32.totalorder %s32, 0
      %s35 = sadd.s32 %s34, 1
      %s36 = scalar_select %p33, %s34, %s35
      %p39 = pneg %p33
      %p40 = scmp.eq.s32.totalorder %s24, 1
      %p41 = por %p39, %p40
      %p42 = scmp.ne.s32.totalorder %s34, %s37
      %p43 = scmp.eq.s32.totalorder %s24, 0
      %p44 = por %p42, %p43
      %p45 = scmp.ne.s32.totalorder %s34, %s37
      %p46 = scmp.eq.s32.totalorder %s29, 1
      %p47 = por %p45, %p46
      %p48 = scmp.ne.s32.totalorder %s37, %s38
      %p49 = scmp.eq.s32.totalorder %s29, 0
      %p50 = por %p48, %p49
      %p51 = scmp.ne.s32.totalorder %s37, %s38
      %p52 = scmp.eq.s32.totalorder %s30, 1
      %p53 = por %p51, %p52
      %p55 = scmp.ne.s32.totalorder %s38, %s54
      %p56 = scmp.eq.s32.totalorder %s30, 0
      %p57 = por %p55, %p56
      %s59 = sadd.s32 %s58, 1
      %p62 = scmp.eq.s32.totalorder %s24, 1
      %p63 = scmp.ne.s32.totalorder %s58, %s60
      %p64 = scmp.eq.s32.totalorder %s24, 0
      %p65 = por %p63, %p64
      %p66 = scmp.ne.s32.totalorder %s58, %s60
      %p67 = scmp.eq.s32.totalorder %s29, 1
      %p68 = por %p66, %p67
      %p69 = scmp.ne.s32.totalorder %s60, %s61
      %p70 = scmp.eq.s32.totalorder %s29, 0
      %p71 = por %p69, %p70
      %p72 = scmp.ne.s32.totalorder %s60, %s61
      %p73 = scmp.eq.s32.totalorder %s30, 1
      %p74 = por %p72, %p73
      %p76 = scmp.ne.s32.totalorder %s61, %s75
      %p77 = scmp.eq.s32.totalorder %s30, 0
      %p78 = por %p76, %p77
      %s80 = sadd.s32 %s79, 1
      %p83 = scmp.eq.s32.totalorder %s24, 1
      %p84 = scmp.ne.s32.totalorder %s79, %s81
      %p85 = scmp.eq.s32.totalorder %s24, 0
      %p86 = por %p84, %p85
      %p87 = scmp.ne.s32.totalorder %s79, %s81
      %p88 = scmp.eq.s32.totalorder %s29, 1
      %p89 = por %p87, %p88
      %p90 = scmp.ne.s32.totalorder %s81, %s82
      %p91 = scmp.eq.s32.totalorder %s29, 0
      %p92 = por %p90, %p91
      %p93 = scmp.ne.s32.totalorder %s81, %s82
      %p94 = scmp.eq.s32.totalorder %s30, 1
      %p95 = por %p93, %p94
      %p97 = scmp.ne.s32.totalorder %s82, %s96
      %p98 = scmp.eq.s32.totalorder %s30, 0
      %p99 = por %p97, %p98
      %s101 = sadd.s32 %s100, 1
      %p104 = scmp.eq.s32.totalorder %s24, 1
      %p105 = scmp.ne.s32.totalorder %s100, %s102
      %p106 = scmp.eq.s32.totalorder %s24, 0
      %p107 = por %p105, %p106
      %p108 = scmp.ne.s32.totalorder %s100, %s102
      %p109 = scmp.eq.s32.totalorder %s29, 1
      %p110 = por %p108, %p109
      %p111 = scmp.ne.s32.totalorder %s102, %s103
      %p112 = scmp.eq.s32.totalorder %s29, 0
      %p113 = por %p111, %p112
      %p114 = scmp.ne.s32.totalorder %s102, %s103
      %p115 = scmp.eq.s32.totalorder %s30, 1
      %p116 = por %p114, %p115
      %p118 = scmp.ne.s32.totalorder %s103, %s117
      %p119 = scmp.eq.s32.totalorder %s30, 0
      %p120 = por %p118, %p119
      %s122 = sadd.s32 %s121, 1
      %p125 = scmp.eq.s32.totalorder %s24, 1
      %p126 = scmp.ne.s32.totalorder %s121, %s123
      %p127 = scmp.eq.s32.totalorder %s24, 0
      %p128 = por %p126, %p127
      %p129 = scmp.ne.s32.totalorder %s121, %s123
      %p130 = scmp.eq.s32.totalorder %s29, 1
      %p131 = por %p129, %p130
      %p132 = scmp.ne.s32.totalorder %s123, %s124
      %p133 = scmp.eq.s32.totalorder %s29, 0
      %p134 = por %p132, %p133
      %p135 = scmp.ne.s32.totalorder %s123, %s124
      %p136 = scmp.eq.s32.totalorder %s30, 1
      %p137 = por %p135, %p136
      %p139 = scmp.ne.s32.totalorder %s124, %s138
      %p140 = scmp.eq.s32.totalorder %s30, 0
      %p141 = por %p139, %p140
      %s143 = sadd.s32 %s142, 1
      %p146 = scmp.eq.s32.totalorder %s24, 1
      %p147 = scmp.ne.s32.totalorder %s142, %s144
      %p148 = scmp.eq.s32.totalorder %s24, 0
      %p149 = por %p147, %p148
      %p150 = scmp.ne.s32.totalorder %s142, %s144
      %p151 = scmp.eq.s32.totalorder %s29, 1
      %p152 = por %p150, %p151
      %p153 = scmp.ne.s32.totalorder %s144, %s145
      %p154 = scmp.eq.s32.totalorder %s29, 0
      %p155 = por %p153, %p154
      %p156 = scmp.ne.s32.totalorder %s144, %s145
      %p157 = scmp.eq.s32.totalorder %s30, 1
      %p158 = por %p156, %p157
      %p160 = scmp.ne.s32.totalorder %s145, %s159
      %p161 = scmp.eq.s32.totalorder %s30, 0
      %p162 = por %p160, %p161
      %s163 = ssub.s32 %s24, %s31
      %p164 = scmp.eq.s32.totalorder %s163, 0
      %s166 = sadd.s32 %s165, 1
      %s167 = scalar_select %p164, %s165, %s166
      %p170 = pneg %p164
      %p171 = scmp.eq.s32.totalorder %s24, 1
      %p172 = por %p170, %p171
      %p173 = scmp.ne.s32.totalorder %s165, %s168
      %p174 = scmp.eq.s32.totalorder %s24, 0
      %p175 = por %p173, %p174
      %p176 = scmp.ne.s32.totalorder %s165, %s168
      %p177 = scmp.eq.s32.totalorder %s29, 1
      %p178 = por %p176, %p177
      %p179 = scmp.ne.s32.totalorder %s168, %s169
      %p180 = scmp.eq.s32.totalorder %s29, 0
      %p181 = por %p179, %p180
      %p182 = scmp.ne.s32.totalorder %s168, %s169
      %p183 = scmp.eq.s32.totalorder %s30, 1
      %p184 = por %p182, %p183
      %p186 = scmp.ne.s32.totalorder %s169, %s185
      %p187 = scmp.eq.s32.totalorder %s30, 0
      %p188 = por %p186, %p187
      %s189 = ssub.s32 %s24, %s31
      %p190 = scmp.eq.s32.totalorder %s189, 0
      %s192 = sadd.s32 %s191, 1
      %s193 = scalar_select %p190, %s191, %s192
      %p196 = pneg %p190
      %p197 = scmp.eq.s32.totalorder %s24, 1
      %p198 = por %p196, %p197
      %p199 = scmp.ne.s32.totalorder %s191, %s194
      %p200 = scmp.eq.s32.totalorder %s24, 0
      %p201 = por %p199, %p200
      %p202 = scmp.ne.s32.totalorder %s191, %s194
      %p203 = scmp.eq.s32.totalorder %s29, 1
      %p204 = por %p202, %p203
      %p205 = scmp.ne.s32.totalorder %s194, %s195
      %p206 = scmp.eq.s32.totalorder %s29, 0
      %p207 = por %p205, %p206
      %p208 = scmp.ne.s32.totalorder %s194, %s195
      %p209 = scmp.eq.s32.totalorder %s30, 1
      %p210 = por %p208, %p209
      %p212 = scmp.ne.s32.totalorder %s195, %s211
      %p213 = scmp.eq.s32.totalorder %s30, 0
      %p214 = por %p212, %p213
      %p215 = scmp.le.s32.totalorder 1, %s24
      %p216 = scmp.lt.s32.totalorder %s24, 3
      %p217 = pnand %p215, %p216
      %p218 = pneg %p217
      // Predicated region
      $region9: #{tpu_custom_call.1} parent=5 // pred_check
        _
      $region10: #{tpu_custom_call.1} parent=5 // pred_check_branch
        %220 = sbr.rel (%p217) target = $region12
      $region11: #{tpu_custom_call.1} parent=5 // pred_region
        %s221 = ssub.s32 %s24, 1
        // Predicated region
        $region13: #{tpu_custom_call.1} parent=11 // pred_check
          %p222 = pneg %p71
        $region14: #{tpu_custom_call.1} parent=11 // pred_check_branch
          %224 = sbr.rel (%p222) target = $region16
        $region15: #{tpu_custom_call.1} parent=11 // pred_region
          %s226 = ssub.s32 256, 256
          %227 = vsyncadd [#allocation6], %s226
          %s228 = sshll.u32 [#allocation5], 4
          %s229 = int_to_ptr.vmem [resolvable:$true] %s228
          %234 = dma.hbm_to_vmem [thread:$0]  %s1, 256, %s229, [#allocation6], 64, 64, 4
        $region16: #{tpu_custom_call.1} parent=11 // pred_fallthru
          _
        // Predicated region
        $region17: #{tpu_custom_call.1} parent=11 // pred_check
          %p235 = pneg %p92
        $region18: #{tpu_custom_call.1} parent=11 // pred_check_branch
          %237 = sbr.rel (%p235) target = $region20
        $region19: #{tpu_custom_call.1} parent=11 // pred_region
          %s239 = ssub.s32 256, 256
          %240 = vsyncadd [#allocation6], %s239
          %s241 = sshll.u32 [#allocation7], 4
          %s242 = int_to_ptr.vmem [resolvable:$true] %s241
          %247 = dma.hbm_to_vmem [thread:$0]  %s2, 256, %s242, [#allocation6], 64, 64, 4
        $region20: #{tpu_custom_call.1} parent=11 // pred_fallthru
          _
        // Predicated region
        $region21: #{tpu_custom_call.1} parent=11 // pred_check
          %p248 = pneg %p113
        $region22: #{tpu_custom_call.1} parent=11 // pred_check_branch
          %250 = sbr.rel (%p248) target = $region24
        $region23: #{tpu_custom_call.1} parent=11 // pred_region
          _
        $region24: #{tpu_custom_call.1} parent=11 // pred_fallthru
          _
        // Predicated region
        $region25: #{tpu_custom_call.1} parent=11 // pred_check
          %p251 = pneg %p134
        $region26: #{tpu_custom_call.1} parent=11 // pred_check_branch
          %253 = sbr.rel (%p251) target = $region28
        $region27: #{tpu_custom_call.1} parent=11 // pred_region
          _
        $region28: #{tpu_custom_call.1} parent=11 // pred_fallthru
          _
        // Predicated region
        $region29: #{tpu_custom_call.1} parent=11 // pred_check
          %p254 = pneg %p155
        $region30: #{tpu_custom_call.1} parent=11 // pred_check_branch
          %256 = sbr.rel (%p254) target = $region32
        $region31: #{tpu_custom_call.1} parent=11 // pred_region
          _
        $region32: #{tpu_custom_call.1} parent=11 // pred_fallthru
          _
      $region12: #{tpu_custom_call.1} parent=5 // pred_fallthru
        _
      %p257 = scmp.lt.s32.totalorder %s24, 2
      // Predicated region
      $region33: #{tpu_custom_call.1} parent=5 // pred_check
        %p258 = pneg %p257
      $region34: #{tpu_custom_call.1} parent=5 // pred_check_branch
        %260 = sbr.rel (%p258) target = $region36
      $region35: #{tpu_custom_call.1} parent=5 // pred_region
        // Predicated region
        $region37: #{tpu_custom_call.1} parent=35 // pred_check
          %p261 = pneg %p44
        $region38: #{tpu_custom_call.1} parent=35 // pred_check_branch
          %263 = sbr.rel (%p261) target = $region40
        $region39: #{tpu_custom_call.1} parent=35 // pred_region
          %s264 = sand.u32 %s34, 1
          %s265 = scalar_lea.sflag [#allocation3], %s264
          %s266 = sand.u32 %s34, 1
          %s267 = smul.addr %s266, 4
          %s268 = scalar_lea.vmem [#allocation2], %s267
          %s270 = ssub.s32 64, 64
          %271 = vsyncadd %s265, %s270
          %s272 = smul.addr %s24, 64
          %s273 = scalar_lea.hbm %s0, %s272
          %s275 = sshll.u32 %s268, 4
          %s276 = int_to_ptr.vmem [resolvable:$true] %s275
          %278 = dma.hbm_to_vmem [thread:$0]  %s273, 64, %s276, %s265
        $region40: #{tpu_custom_call.1} parent=35 // pred_fallthru
          _
      $region36: #{tpu_custom_call.1} parent=5 // pred_fallthru
        _
      %p279 = scmp.le.s32.totalorder 1, %s24
      %p280 = scmp.lt.s32.totalorder %s24, 3
      %p281 = pnand %p279, %p280
      %p282 = pneg %p281
      // Predicated region
      $region41: #{tpu_custom_call.1} parent=5 // pred_check
        _
      $region42: #{tpu_custom_call.1} parent=5 // pred_check_branch
        %284 = sbr.rel (%p281) target = $region44
      $region43: #{tpu_custom_call.1} parent=5 // pred_region
        %s285 = ssub.s32 %s24, 1
        %s286 = sand.u32 %s37, 1
        %s287 = scalar_lea.sflag [#allocation3], %s286
        %s288 = sand.u32 %s37, 1
        %s289 = smul.addr %s288, 4
        %s290 = scalar_lea.vmem [#allocation2], %s289
        // Predicated region
        $region45: #{tpu_custom_call.1} parent=43 // pred_check
          %p291 = pneg %p50
        $region46: #{tpu_custom_call.1} parent=43 // pred_check_branch
          %293 = sbr.rel (%p291) target = $region48
        $region47: #{tpu_custom_call.1} parent=43 // pred_region
          %294 = dma.done %s287, 64
        $region48: #{tpu_custom_call.1} parent=43 // pred_fallthru
          _
        // Predicated region
        $region49: #{tpu_custom_call.1} parent=43 // pred_check
          %p295 = pneg %p71
        $region50: #{tpu_custom_call.1} parent=43 // pred_check_branch
          %297 = sbr.rel (%p295) target = $region52
        $region51: #{tpu_custom_call.1} parent=43 // pred_region
          %298 = dma.done [#allocation6], 256
        $region52: #{tpu_custom_call.1} parent=43 // pred_fallthru
          _
        // Predicated region
        $region53: #{tpu_custom_call.1} parent=43 // pred_check
          %p299 = pneg %p92
        $region54: #{tpu_custom_call.1} parent=43 // pred_check_branch
          %301 = sbr.rel (%p299) target = $region56
        $region55: #{tpu_custom_call.1} parent=43 // pred_region
          %302 = dma.done [#allocation6], 256
        $region56: #{tpu_custom_call.1} parent=43 // pred_fallthru
          _
        %s303 = sand.u32 %s37, 1
        %s304 = scalar_lea.sflag [#allocation3], %s303
        %s305 = sand.u32 %s37, 1
        %s306 = smul.addr %s305, 4
        %s307 = scalar_lea.vmem [#allocation2], %s306
        %p308 = pneg %p50
        %p309 = pneg %p47
        %p310 = pneg %p71
        %p311 = pneg %p68
        %p312 = pneg %p92
        %p313 = pneg %p89
        %p314 = pneg %p113
        %p315 = pneg %p110
        %p316 = pneg %p134
        %p317 = pneg %p131
        %p318 = pneg %p155
        %p319 = pneg %p152
        %p320 = pneg %p181
        %p321 = pneg %p178
        %s322 = sand.u32 %s168, 1
        %s323 = scalar_lea.sflag [#allocation4], %s322
        %s324 = sand.u32 %s168, 1
        %s325 = smul.addr %s324, 16
        %s326 = scalar_lea.vmem [#allocation8], %s325
        %p327 = pneg %p207
        %p328 = pneg %p204
        %s329 = sand.u32 %s194, 1
        %s330 = scalar_lea.sflag [#allocation10], %s329
        %s331 = sand.u32 %s194, 1
        %s332 = smul.addr %s331, 16
        %s333 = scalar_lea.vmem [#allocation9], %s332
        %v335 = vld [vmem:[%s290] sm:$0xf]
        %v336 = vld [vmem:[#allocation5] sm:$0xf]
        %v337 = vld [vmem:[#allocation5 + $0x4] sm:$0xf]
        %v338 = vld [vmem:[#allocation5 + $0x8] sm:$0xf]
        %v339 = vld [vmem:[#allocation5 + $0xc] sm:$0xf]
        %v344 = vunpack.c.l.b16 %v336
        %v345 = vunpack.c.l.b16 %v337
        %v346 = vunpack.c.l.b16 %v338
        %v347 = vunpack.c.l.b16 %v339
        %v348 = vpack.c.b16 %v345, %v344
        %v349 = vpack.c.b16 %v347, %v346
        %vm352 = vcmask 261120
        %v354 = vsel %vm352, %v335, 0
        %356 = vmatprep.subr.bf16.mxu0 0
        %357 = vmatpush1.bf16.msra.mxu0 %v348
        %358 = vmatprep.subr.bf16.mxu0 0
        %359 = vmatpush1.bf16.msra.mxu0 %v349
        %360 = vmatprep.subr.bf16.mxu0 0
        %361 = vmatpush1.bf16.msra.mxu0 0
        %362 = vmatprep.subr.bf16.mxu0 0
        %363 = vmatpush1.bf16.msra.mxu0 0
        %364 = vmatprep.subr.bf16.mxu0 0
        %365 = vmatpush1.bf16.msra.mxu0 0
        %366 = vmatprep.subr.bf16.mxu0 0
        %367 = vmatpush1.bf16.msra.mxu0 0
        %368 = vmatprep.subr.bf16.mxu0 0
        %369 = vmatpush1.bf16.msra.mxu0 0
        %370 = vmatprep.subr.bf16.mxu0 0
        %371 = vmatpush1.bf16.msra.mxu0 0
        %372 = vmatprep.subr.bf16.mxu0 0
        %373 = vmatpush1.bf16.msra.mxu0 0
        %374 = vmatprep.subr.bf16.mxu0 0
        %375 = vmatpush1.bf16.msra.mxu0 0
        %376 = vmatprep.subr.bf16.mxu0 0
        %377 = vmatpush1.bf16.msra.mxu0 0
        %378 = vmatprep.subr.bf16.mxu0 0
        %379 = vmatpush1.bf16.msra.mxu0 0
        %380 = vmatprep.subr.bf16.mxu0 0
        %381 = vmatpush1.bf16.msra.mxu0 0
        %382 = vmatprep.subr.bf16.mxu0 0
        %383 = vmatpush1.bf16.msra.mxu0 0
        %384 = vmatprep.subr.bf16.mxu0 0
        %385 = vmatpush1.bf16.msra.mxu0 0
        %386 = vmatprep.subr.bf16.mxu0 0
        %387 = vmatpush1.bf16.msra.mxu0 0
        %388 = vmatprep.mubr.bf16.mxu0 0
        %389 = vmatmul.mubr.bf16.gmra.mrb[0].mxu0 %v354
        %v390 = vpop.f32.mrb[0].mxu0
        %v391 = vadd.f32 0.0, %v390
        %v392 = vpop.f32.mrb[0].mxu0
        %v393 = vpop.f32.mrb[0].mxu0
        %v394 = vpop.f32.mrb[0].mxu0
        %395 = vdwg.mxu0
        %v396 = vld [vmem:[#allocation7] sm:$0xf]
        %v397 = vld [vmem:[#allocation7 + $0x4] sm:$0xf]
        %v398 = vld [vmem:[#allocation7 + $0x8] sm:$0xf]
        %v399 = vld [vmem:[#allocation7 + $0xc] sm:$0xf]
        %v404 = vunpack.c.l.b16 %v396
        %v405 = vunpack.c.l.b16 %v397
        %v406 = vunpack.c.l.b16 %v398
        %v407 = vunpack.c.l.b16 %v399
        %v408 = vpack.c.b16 %v405, %v404
        %v409 = vpack.c.b16 %v407, %v406
        %412 = vmatprep.subr.bf16.mxu0 0
        %413 = vmatpush1.bf16.msra.mxu0 %v408
        %414 = vmatprep.subr.bf16.mxu0 0
        %415 = vmatpush1.bf16.msra.mxu0 %v409
        %416 = vmatprep.subr.bf16.mxu0 0
        %417 = vmatpush1.bf16.msra.mxu0 0
        %418 = vmatprep.subr.bf16.mxu0 0
        %419 = vmatpush1.bf16.msra.mxu0 0
        %420 = vmatprep.subr.bf16.mxu0 0
        %421 = vmatpush1.bf16.msra.mxu0 0
        %422 = vmatprep.subr.bf16.mxu0 0
        %423 = vmatpush1.bf16.msra.mxu0 0
        %424 = vmatprep.subr.bf16.mxu0 0
        %425 = vmatpush1.bf16.msra.mxu0 0
        %426 = vmatprep.subr.bf16.mxu0 0
        %427 = vmatpush1.bf16.msra.mxu0 0
        %428 = vmatprep.subr.bf16.mxu0 0
        %429 = vmatpush1.bf16.msra.mxu0 0
        %430 = vmatprep.subr.bf16.mxu0 0
        %431 = vmatpush1.bf16.msra.mxu0 0
        %432 = vmatprep.subr.bf16.mxu0 0
        %433 = vmatpush1.bf16.msra.mxu0 0
        %434 = vmatprep.subr.bf16.mxu0 0
        %435 = vmatpush1.bf16.msra.mxu0 0
        %436 = vmatprep.subr.bf16.mxu0 0
        %437 = vmatpush1.bf16.msra.mxu0 0
        %438 = vmatprep.subr.bf16.mxu0 0
        %439 = vmatpush1.bf16.msra.mxu0 0
        %440 = vmatprep.subr.bf16.mxu0 0
        %441 = vmatpush1.bf16.msra.mxu0 0
        %442 = vmatprep.subr.bf16.mxu0 0
        %443 = vmatpush1.bf16.msra.mxu0 0
        %444 = vmatprep.mubr.bf16.mxu0 0
        %445 = vmatmul.mubr.bf16.gmra.mrb[0].mxu0 %v354
        %v446 = vpop.f32.mrb[0].mxu0
        %v447 = vadd.f32 0.0, %v446
        %v448 = vpop.f32.mrb[0].mxu0
        %v449 = vpop.f32.mrb[0].mxu0
        %v450 = vpop.f32.mrb[0].mxu0
        %451 = vdwg.mxu0
        %v452 = vld [vmem:[%s3] sm:$0xf]
        %v453 = vunpack.c.l.bf16 %v452
        %v454 = vld [vmem:[%s4] sm:$0xf]
        %v455 = vunpack.c.l.bf16 %v454
        %v456 = vld [vmem:[%s5] sm:$0xf]
        %v457 = vunpack.c.l.bf16 %v456
        %v458 = vmul.f32 %v391, %v453
        %460 = vrot.lane.b32.xlu0 %v391, 127
        %v461 = vpop.permute.xlu0 %460
        %463 = vrot.lane.b32.xlu0 %v391, 31
        %v464 = vpop.permute.xlu0 %463
        %vm466 = vcmask 252928
        %v467 = vsel %vm466, %v461, %v464
        %v468 = vmul.f32 %v467, %v455
        %v469 = vadd.f32 %v458, %v468
        %470 = vrot.lane.b32.xlu0 %v391, 97
        %v471 = vpop.permute.xlu0 %470
        %473 = vrot.lane.b32.xlu0 %v391, 1
        %v474 = vpop.permute.xlu0 %473
        %vm476 = vcmask 7168
        %v477 = vsel %vm476, %v471, %v474
        %v478 = vmul.f32 %v477, %v457
        %v479 = vadd.f32 %v469, %v478
        %v480 = vpack.c.bf16 %v479, %v479
        %v481 = vpack.c.bf16 %v447, %v447
        %vm482 = vcmask 60416
        %483 = vst.msk [vmem:[%s326] sm:$0xf] %vm482, %v480
        %484 = vst.msk [vmem:[%s333] sm:$0xf] %vm482, %v481
        %v486 = vunpack.c.l.b16 %v480
        %v487 = vpack.c.b16 %v486, %v486
        %488 = vrot.lane.b32.xlu0 %v487, 120
        %v489 = vpop.permute.xlu0 %488
        %s491 = scalar_lea.vmem %s326, 4 [#allocation8]
        %492 = vst.msk [vmem:[%s491] sm:$0xf] %vm482, %v489
        %v494 = vunpack.c.l.b16 %v481
        %v495 = vpack.c.b16 %v494, %v494
        %496 = vrot.lane.b32.xlu0 %v495, 120
        %v497 = vpop.permute.xlu0 %496
        %s499 = scalar_lea.vmem %s333, 4 [#allocation9]
        %500 = vst.msk [vmem:[%s499] sm:$0xf] %vm482, %v497
        %501 = vrot.lane.b32.xlu0 %v487, 112
        %v502 = vpop.permute.xlu0 %501
        %s504 = scalar_lea.vmem %s326, 8 [#allocation8]
        %505 = vst.msk [vmem:[%s504] sm:$0xf] %vm482, %v502
        %506 = vrot.lane.b32.xlu0 %v495, 112
        %v507 = vpop.permute.xlu0 %506
        %s509 = scalar_lea.vmem %s333, 8 [#allocation9]
        %510 = vst.msk [vmem:[%s509] sm:$0xf] %vm482, %v507
        %511 = vrot.lane.b32.xlu0 %v487, 104
        %v512 = vpop.permute.xlu0 %511
        %s514 = scalar_lea.vmem %s326, 12 [#allocation8]
        %515 = vst.msk [vmem:[%s514] sm:$0xf] %vm482, %v512
        %516 = vrot.lane.b32.xlu0 %v495, 104
        %v517 = vpop.permute.xlu0 %516
        %s519 = scalar_lea.vmem %s333, 12 [#allocation9]
        %520 = vst.msk [vmem:[%s519] sm:$0xf] %vm482, %v517
        %s521 = sand.u32 %s168, 1
        %s522 = scalar_lea.sflag [#allocation4], %s521
        %s523 = sand.u32 %s168, 1
        %s524 = smul.addr %s523, 16
        %s525 = scalar_lea.vmem [#allocation8], %s524
        %s526 = sand.u32 %s194, 1
        %s527 = scalar_lea.sflag [#allocation10], %s526
        %s528 = sand.u32 %s194, 1
        %s529 = smul.addr %s528, 16
        %s530 = scalar_lea.vmem [#allocation9], %s529
        // Predicated region
        $region57: #{tpu_custom_call.1} parent=43 // pred_check
          %p531 = pneg %p178
        $region58: #{tpu_custom_call.1} parent=43 // pred_check_branch
          %533 = sbr.rel (%p531) target = $region60
        $region59: #{tpu_custom_call.1} parent=43 // pred_region
          %s535 = ssub.s32 256, 256
          %536 = vsyncadd %s522, %s535
          %s537 = smul.addr %s29, 4
          %s538 = smul.addr %s537, 64
          %s539 = scalar_lea.hbm %s6, %s538
          %s540 = sshll.u32 %s525, 4
          %s541 = int_to_ptr.vmem [resolvable:$true] %s540
          %546 = dma.vmem_to_hbm [thread:$0]  %s541, 256, %s539, %s522, 64, 64, 4
        $region60: #{tpu_custom_call.1} parent=43 // pred_fallthru
          _
        // Predicated region
        $region61: #{tpu_custom_call.1} parent=43 // pred_check
          %p547 = pneg %p204
        $region62: #{tpu_custom_call.1} parent=43 // pred_check_branch
          %549 = sbr.rel (%p547) target = $region64
        $region63: #{tpu_custom_call.1} parent=43 // pred_region
          %s551 = ssub.s32 256, 256
          %552 = vsyncadd %s527, %s551
          %s553 = smul.addr %s29, 4
          %s554 = smul.addr %s553, 64
          %s555 = scalar_lea.hbm %s7, %s554
          %s556 = sshll.u32 %s530, 4
          %s557 = int_to_ptr.vmem [resolvable:$true] %s556
          %562 = dma.vmem_to_hbm [thread:$0]  %s557, 256, %s555, %s527, 64, 64, 4
        $region64: #{tpu_custom_call.1} parent=43 // pred_fallthru
          _
      $region44: #{tpu_custom_call.1} parent=5 // pred_fallthru
        _
      %p563 = scmp.le.s32.totalorder 2, %s24
      // Predicated region
      $region65: #{tpu_custom_call.1} parent=5 // pred_check
        %p564 = pneg %p563
      $region66: #{tpu_custom_call.1} parent=5 // pred_check_branch
        %566 = sbr.rel (%p564) target = $region68
      $region67: #{tpu_custom_call.1} parent=5 // pred_region
        %s567 = ssub.s32 %s24, 2
        // Predicated region
        $region69: #{tpu_custom_call.1} parent=67 // pred_check
          %p568 = pneg %p184
        $region70: #{tpu_custom_call.1} parent=67 // pred_check_branch
          %570 = sbr.rel (%p568) target = $region72
        $region71: #{tpu_custom_call.1} parent=67 // pred_region
          %s571 = sand.u32 %s169, 1
          %s572 = scalar_lea.sflag [#allocation4], %s571
          %s573 = sand.u32 %s169, 1
          %s574 = smul.addr %s573, 16
          %s575 = scalar_lea.vmem [#allocation8], %s574
          %576 = dma.done %s572, 256
        $region72: #{tpu_custom_call.1} parent=67 // pred_fallthru
          _
        // Predicated region
        $region73: #{tpu_custom_call.1} parent=67 // pred_check
          %p577 = pneg %p210
        $region74: #{tpu_custom_call.1} parent=67 // pred_check_branch
          %579 = sbr.rel (%p577) target = $region76
        $region75: #{tpu_custom_call.1} parent=67 // pred_region
          %s580 = sand.u32 %s195, 1
          %s581 = scalar_lea.sflag [#allocation10], %s580
          %s582 = sand.u32 %s195, 1
          %s583 = smul.addr %s582, 16
          %s584 = scalar_lea.vmem [#allocation9], %s583
          %585 = dma.done %s581, 256
        $region76: #{tpu_custom_call.1} parent=67 // pred_fallthru
          _
      $region68: #{tpu_custom_call.1} parent=5 // pred_fallthru
        _
    $region6: #{tpu_custom_call.1} parent=1 // loop_footer
      %s28 = sadd.s32 1, %s24
    $region7: #{tpu_custom_call.1} parent=1 // loop_footer_branch
      %23 = sbr.rel target = $region3
    $region8: #{tpu_custom_call.1} parent=1 // loop_exit
      _
    %586 = vsyncpa [#allocation3], 1
    %s587 = scalar_lea.sflag [#allocation3], 1
    %588 = vsyncpa %s587, 1
    %589 = vsyncpa [#allocation6], 1
    %590 = vsyncpa [#allocation4], 1
    %s591 = scalar_lea.sflag [#allocation4], 1
    %592 = vsyncpa %s591, 1
    %593 = vsyncpa [#allocation10], 1
    %s594 = scalar_lea.sflag [#allocation10], 1
    %595 = vsyncpa %s594, 1

</llo_original>
